<compile_context>
chip_gen: v6e
topology: v6e:2x2x1
jax: 0.10.0
libtpu: 0.0.40
codegen_flags: <defaults>
</compile_context>

<pallas_src>
import functools

import jax
import jax.numpy as jnp
from jax.experimental import pallas as pl
from jax.experimental.pallas import tpu as pltpu

THRESHOLD = 0.4


def _hamming_kernel(x_ref, y_ref, pred_ref, psum_ref, *,
                    tile_rows, lanes, total_elems, needs_mask, threshold):
    i = pl.program_id(0)

    x = x_ref[...].astype(jnp.float32)            # (TR, 128)
    y = y_ref[...].astype(jnp.float32)            # (TR, 128)

    pred = (x >= threshold).astype(jnp.float32)
    pred_ref[...] = pred.astype(pred_ref.dtype)   # full-lane, unmasked stores

    adiff = jnp.abs(pred - y)

    if needs_mask:
        # Flattened layout was zero-padded in the wrapper; mask padded flat
        # elements so they never contribute to the sum.
        row_ids = i * tile_rows + jax.lax.broadcasted_iota(jnp.int32, adiff.shape, 0)
        lane_ids = jax.lax.broadcasted_iota(jnp.int32, adiff.shape, 1)
        flat_ids = row_ids * lanes + lane_ids
        adiff = jnp.where(flat_ids < total_elems, adiff, 0.0)

    # Sublane-only partial reduce; lanes are summed in the wrapper.
    psum_ref[...] = jnp.sum(adiff, axis=0, keepdims=True)


def _pick_tile_rows(total_rows, in_itemsize, pred_itemsize, lanes=128):
    """Byte-targeted row tile: ~4 MiB per input block, double-buffered working
    set (2 * (x + y + pred)) under ~28 MiB, and >= 2 grid steps when the data
    is big enough (so the 'parallel' axis can shard across v7x's 2 TCs)."""
    target_block_bytes = 4 * 1024 * 1024
    ws_budget_bytes = 28 * 1024 * 1024

    in_row_bytes = lanes * in_itemsize
    tr = target_block_bytes // in_row_bytes

    ws_row_bytes = 2 * (2 * lanes * in_itemsize + lanes * pred_itemsize)
    tr = min(tr, ws_budget_bytes // ws_row_bytes)

    # Keep at least two grid steps when possible (cheap on 1-TC v5e/v6e,
    # up to 2x on v7x).
    if total_rows > 8:
        tr = min(tr, (total_rows + 1) // 2)

    tr = max(8, (tr // 8) * 8)
    tr = min(tr, max(8, ((total_rows + 7) // 8) * 8))
    return int(tr)


def hamming_loss(x, y, *, threshold=THRESHOLD, pred_dtype=None):
    """x, y: (B, C).  Returns (scalar hamming loss, y_pred_sign (B, C))."""
    B, C = x.shape
    N = B * C
    if pred_dtype is None:
        pred_dtype = x.dtype    # 0.0/1.0 exact; use jnp.float32 to force .float()

    lanes = 128
    rows = pl.cdiv(N, lanes)
    tr = _pick_tile_rows(rows, jnp.dtype(x.dtype).itemsize,
                         jnp.dtype(pred_dtype).itemsize, lanes)
    num_tiles = pl.cdiv(rows, tr)
    padded_rows = num_tiles * tr
    padded_n = padded_rows * lanes
    needs_mask = padded_n != N

    # Lane-dense flatten (free reshape for contiguous inputs; pad only if the
    # flat size is not a tile multiple).
    x_flat = x.reshape(-1)
    y_flat = y.reshape(-1)
    if needs_mask:
        pad = padded_n - N
        x_flat = jnp.pad(x_flat, (0, pad))
        y_flat = jnp.pad(y_flat, (0, pad))
    x2 = x_flat.reshape(padded_rows, lanes)
    y2 = y_flat.reshape(padded_rows, lanes)

    kernel = functools.partial(
        _hamming_kernel, tile_rows=tr, lanes=lanes, total_elems=N,
        needs_mask=needs_mask, threshold=float(threshold))

    in_bytes = 2 * padded_n * jnp.dtype(x.dtype).itemsize
    out_bytes = padded_n * jnp.dtype(pred_dtype).itemsize + num_tiles * lanes * 4

    pred2, psum = pl.pallas_call(
        kernel,
        grid=(num_tiles,),
        in_specs=[
            pl.BlockSpec((tr, lanes), lambda i: (i, 0)),
            pl.BlockSpec((tr, lanes), lambda i: (i, 0)),
        ],
        out_specs=(
            pl.BlockSpec((tr, lanes), lambda i: (i, 0)),
            pl.BlockSpec((1, lanes), lambda i: (i, 0)),
        ),
        out_shape=(
            jax.ShapeDtypeStruct((padded_rows, lanes), pred_dtype),   # y_pred_sign
            jax.ShapeDtypeStruct((num_tiles, lanes), jnp.float32),    # partial sums
        ),
        compiler_params=pltpu.CompilerParams(
            dimension_semantics=("parallel",),
            vmem_limit_bytes=32 * 1024 * 1024,
        ),
        cost_estimate=pl.CostEstimate(
            flops=4 * N,
            transcendentals=0,
            bytes_accessed=int(in_bytes + out_bytes),
        ),
    )(x2, y2)

    loss = jnp.sum(psum) * (1.0 / N)

    pred_flat = pred2.reshape(-1)
    if needs_mask:
        pred_flat = pred_flat[:N]
    pred = pred_flat.reshape(B, C)
    return loss, pred


def _reference(x, y, threshold=THRESHOLD):
    pred = (x >= threshold).astype(jnp.float32)
    loss = jnp.mean(jnp.abs(pred - y))
    return loss, pred


if __name__ == "__main__":
    key = jax.random.PRNGKey(0)
    kx, ky = jax.random.split(key)

    B, C = 16, 32   # (batch, num_labels)
    x = jax.random.uniform(kx, (B, C), dtype=jnp.float32)          # "probabilities"
    y = jax.random.bernoulli(ky, 0.5, (B, C)).astype(jnp.float32)  # multi-hot targets

    loss, pred = hamming_loss(x, y)
    jax.block_until_ready((loss, pred))

    loss_ref, pred_ref = _reference(x, y)
    assert jnp.allclose(loss, loss_ref, atol=1e-6, rtol=1e-6), (loss, loss_ref)
    assert jnp.array_equal(pred.astype(jnp.float32), pred_ref)

    print("KERNEL_OK")
</pallas_src>

<mosaic_0001>
module attributes {stable_mosaic.version = 11 : i64} {
  func.func @_hamming_kernel(%arg0: i32, %arg1: memref<8x128xf32, #tpu.memory_space<vmem>>, %arg2: memref<8x128xf32, #tpu.memory_space<vmem>>, %arg3: memref<8x128xf32, #tpu.memory_space<vmem>>, %arg4: memref<1x128xf32, #tpu.memory_space<vmem>>) attributes {dimension_semantics = [#tpu.dimension_semantics<parallel>], iteration_bounds = array<i64: 1>, scalar_prefetch = 0 : i64, scratch_operands = 0 : i64, tpu.core_type = #tpu.core_type<tc>, window_params = [{transform_indices = @transform_0, window_bounds = array<i64: 8, 128>}, {transform_indices = @transform_1, window_bounds = array<i64: 8, 128>}, {transform_indices = @transform_2, window_bounds = array<i64: 8, 128>}, {transform_indices = @transform_3, window_bounds = array<i64: 1, 128>}]} {
    %c0 = arith.constant 0 : index
    %c0_0 = arith.constant 0 : index
    %0 = vector.load %arg1[%c0, %c0_0] : memref<8x128xf32, #tpu.memory_space<vmem>>, vector<8x128xf32>
    %c0_1 = arith.constant 0 : index
    %c0_2 = arith.constant 0 : index
    %1 = vector.load %arg2[%c0_1, %c0_2] : memref<8x128xf32, #tpu.memory_space<vmem>>, vector<8x128xf32>
    %cst = arith.constant 4.000000e-01 : f32
    %2 = vector.broadcast %cst : f32 to vector<8x128xf32>
    %3 = arith.cmpf oge, %0, %2 : vector<8x128xf32>
    %4 = arith.extui %3 : vector<8x128xi1> to vector<8x128xi32>
    %5 = arith.sitofp %4 : vector<8x128xi32> to vector<8x128xf32>
    %c0_3 = arith.constant 0 : index
    %c0_4 = arith.constant 0 : index
    %6 = vector.load %arg3[%c0_3, %c0_4] : memref<8x128xf32, #tpu.memory_space<vmem>>, vector<8x128xf32>
    tpu.vector_store %arg3[%c0_3, %c0_4], %5 {strides = array<i32>} : memref<8x128xf32, #tpu.memory_space<vmem>>, vector<8x128xf32>,
    %7 = arith.subf %5, %1 : vector<8x128xf32>
    %8 = math.absf %7 : vector<8x128xf32>
    %c8_i32 = arith.constant 8 : i32
    %9 = arith.muli %arg0, %c8_i32 : i32
    %10 = tpu.iota {dimensions = array<i32: 0>} : vector<8x128xi32>
    %11 = vector.broadcast %9 : i32 to vector<8x128xi32>
    %12 = arith.addi %11, %10 : vector<8x128xi32>
    %13 = tpu.iota {dimensions = array<i32: 1>} : vector<8x128xi32>
    %c128_i32 = arith.constant 128 : i32
    %14 = vector.broadcast %c128_i32 : i32 to vector<8x128xi32>
    %15 = arith.muli %12, %14 : vector<8x128xi32>
    %16 = arith.addi %15, %13 : vector<8x128xi32>
    %c512_i32 = arith.constant 512 : i32
    %17 = vector.broadcast %c512_i32 : i32 to vector<8x128xi32>
    %18 = arith.cmpi slt, %16, %17 : vector<8x128xi32>
    %cst_5 = arith.constant 0.000000e+00 : f32
    %19 = vector.broadcast %cst_5 : f32 to vector<8x128xf32>
    %20 = arith.select %18, %8, %19 : vector<8x128xi1>, vector<8x128xf32>
    %cst_6 = arith.constant dense<0.000000e+00> : vector<128xf32>
    %21 = vector.multi_reduction <add>, %20, %cst_6 [0] : vector<8x128xf32> to vector<128xf32>
    %22 = vector.shape_cast %21 : vector<128xf32> to vector<1x128xf32>
    %c0_7 = arith.constant 0 : index
    %c0_8 = arith.constant 0 : index
    %23 = vector.load %arg4[%c0_7, %c0_8] : memref<1x128xf32, #tpu.memory_space<vmem>>, vector<1x128xf32>
    tpu.vector_store %arg4[%c0_7, %c0_8], %22 {strides = array<i32>} : memref<1x128xf32, #tpu.memory_space<vmem>>, vector<1x128xf32>,
    return
  }
  func.func @transform_0(%arg0: i32) -> (i32, i32) {
    %c0_i32 = arith.constant 0 : i32
    %c0_i32_0 = arith.constant 0 : i32
    return %arg0, %c0_i32 : i32, i32
  }
  func.func @transform_1(%arg0: i32) -> (i32, i32) {
    %c0_i32 = arith.constant 0 : i32
    %c0_i32_0 = arith.constant 0 : i32
    return %arg0, %c0_i32 : i32, i32
  }
  func.func @transform_2(%arg0: i32) -> (i32, i32) {
    %c0_i32 = arith.constant 0 : i32
    %c0_i32_0 = arith.constant 0 : i32
    return %arg0, %c0_i32 : i32, i32
  }
  func.func @transform_3(%arg0: i32) -> (i32, i32) {
    %c0_i32 = arith.constant 0 : i32
    %c0_i32_0 = arith.constant 0 : i32
    return %arg0, %c0_i32 : i32, i32
  }
}

</mosaic_0001>

<llo_original>
// kernel: tpu_custom_call.1
$region0: #{tpu_custom_call.1}
  #allocation0 [shape = 'u32[]', space=smem, size = 0x4, offset = 0x4, fixed_abs, tag = 'smem constant byte address 0x4 - core index']
  #allocation1 [shape = 'u32[144,128]{1,0:T(1,128)}', space=vmem, size = 0x12000, scoped, tag = 'internal scratch']
  %s0 = inlined_call_operand.hbm [shape: f32[8,128], index: 0, kind: input, shape index: {}]
  %s1 = inlined_call_operand.hbm [shape: f32[8,128], index: 1, kind: input, shape index: {}]
  %s2 = inlined_call_operand.hbm [shape: f32[8,128], index: 2, kind: output, shape index: {0}]
  %s3 = inlined_call_operand.hbm [shape: f32[1,128], index: 3, kind: output, shape index: {1}]
  %4 = xla_tuple %s2, %s3
  %s5 = sld [smem:[#allocation0]]
  $region34: #{tpu_custom_call.1} parent=0
    _
  %s7 = ssub.s32 1, %s5
  %s8 = scalar_select 0, %s7, %s5
  $region1: #{tpu_custom_call.1} parent=0
    #allocation2 [shape = 'u8[4096]{0}', space=vmem, size = 0x1000, scoped, tag = 'input window, operand 0, single buffered']
    #allocation3 [shape = 's32[1]{0}', space=sflag, size = 0x4, scoped, tag = 'scoped memory for tpu_custom_call.1']
    #allocation4 [shape = 's32[1]{0}', space=sflag, size = 0x4, scoped, tag = 'scoped memory for tpu_custom_call.1']
    #allocation5 [shape = 'u8[4096]{0}', space=vmem, size = 0x1000, scoped, tag = 'input window, operand 1, single buffered']
    #allocation6 [shape = 's32[1]{0}', space=sflag, size = 0x4, scoped, tag = 'scoped memory for tpu_custom_call.1']
    #allocation7 [shape = 'u8[4096]{0}', space=vmem, size = 0x1000, scoped, tag = 'output window, operand 0, single buffered']
    #allocation8 [shape = 'u8[512]{0}', space=vmem, size = 0x400, scoped, tag = 'output window, operand 1, single buffered']
    #allocation9 [shape = 's32[1]{0}', space=sflag, size = 0x4, scoped, tag = 'scoped memory for tpu_custom_call.1']
    %9 = vsyncpa [#allocation3], 0
    %10 = vsyncpa [#allocation6], 0
    %11 = vsyncpa [#allocation4], 0
    %12 = vsyncpa [#allocation9], 0
    // Predicated region
    $region2: #{tpu_custom_call.1} parent=1 // pred_check
      _
    $region3: #{tpu_custom_call.1} parent=1 // pred_check_branch
      %14 = sbr.rel (0) target = $region5
    $region4: #{tpu_custom_call.1} parent=1 // pred_region
      %s16 = ssub.s32 128, 128
      %17 = vsyncadd [#allocation3], %s16
      %s19 = sshll.u32 [#allocation2], 4
      %s20 = int_to_ptr.vmem [resolvable:$true] %s19
      %22 = dma.hbm_to_vmem [thread:$0]  %s0, 128, %s20, [#allocation3]
    $region5: #{tpu_custom_call.1} parent=1 // pred_fallthru
      _
    // Predicated region
    $region6: #{tpu_custom_call.1} parent=1 // pred_check
      _
    $region7: #{tpu_custom_call.1} parent=1 // pred_check_branch
      %24 = sbr.rel (0) target = $region9
    $region8: #{tpu_custom_call.1} parent=1 // pred_region
      %s26 = ssub.s32 128, 128
      %27 = vsyncadd [#allocation6], %s26
      %s29 = sshll.u32 [#allocation5], 4
      %s30 = int_to_ptr.vmem [resolvable:$true] %s29
      %32 = dma.hbm_to_vmem [thread:$0]  %s1, 128, %s30, [#allocation6]
    $region9: #{tpu_custom_call.1} parent=1 // pred_fallthru
      _
    // Predicated region
    $region10: #{tpu_custom_call.1} parent=1 // pred_check
      _
    $region11: #{tpu_custom_call.1} parent=1 // pred_check_branch
      %34 = sbr.rel (0) target = $region13
    $region12: #{tpu_custom_call.1} parent=1 // pred_region
      %35 = dma.done [#allocation3], 128
    $region13: #{tpu_custom_call.1} parent=1 // pred_fallthru
      _
    // Predicated region
    $region14: #{tpu_custom_call.1} parent=1 // pred_check
      _
    $region15: #{tpu_custom_call.1} parent=1 // pred_check_branch
      %37 = sbr.rel (0) target = $region17
    $region16: #{tpu_custom_call.1} parent=1 // pred_region
      %38 = dma.done [#allocation6], 128
    $region17: #{tpu_custom_call.1} parent=1 // pred_fallthru
      _
    %v39 = vld [vmem:[#allocation2] sm:$0xff]
    %v40 = vld [vmem:[#allocation5] sm:$0xff]
    %vm41 = vcmp.ge.f32.partialorder %v39, 0.4
    %v42 = vsel %vm41, 1, 0
    %v43 = vcvt.s32.f32 %v42
    %44 = vst [vmem:[#allocation7] sm:$0xff] %v43
    %v45 = vsub.f32 %v43, %v40
    %v46 = vand.u32 2147483647, %v45
    %s47 = smul.u32 0, 8
    %v48 = vlaneseq
    %v49 = vshrl.u32 %v48, 7
    %v50 = vstv %s47
    %v51 = vadd.s32 %v50, %v49
    %v52 = vlaneseq
    %v53 = vand.u32 %v52, 127
    %v54 = vmul.u32 %v51, 128
    %v55 = vadd.s32 %v54, %v53
    %vm56 = vcmp.lt.s32.totalorder %v55, 512
    %v57 = vsel %vm56, %v46, 0.0
    %v58 = vrot.slane %v57, 4
    %v59 = vadd.f32 %v57, %v58
    %v60 = vrot.slane %v59, 2
    %v61 = vadd.f32 %v59, %v60
    %v62 = vrot.slane %v61, 1
    %v63 = vadd.f32 %v61, %v62
    %64 = vst [vmem:[#allocation8] sm:$0x1] %v63
    // Predicated region
    $region18: #{tpu_custom_call.1} parent=1 // pred_check
      _
    $region19: #{tpu_custom_call.1} parent=1 // pred_check_branch
      %66 = sbr.rel (0) target = $region21
    $region20: #{tpu_custom_call.1} parent=1 // pred_region
      %s68 = ssub.s32 128, 128
      %69 = vsyncadd [#allocation4], %s68
      %s71 = sshll.u32 [#allocation7], 4
      %s72 = int_to_ptr.vmem [resolvable:$true] %s71
      %74 = dma.vmem_to_hbm [thread:$0]  %s72, 128, %s2, [#allocation4]
    $region21: #{tpu_custom_call.1} parent=1 // pred_fallthru
      _
    // Predicated region
    $region22: #{tpu_custom_call.1} parent=1 // pred_check
      _
    $region23: #{tpu_custom_call.1} parent=1 // pred_check_branch
      %76 = sbr.rel (0) target = $region25
    $region24: #{tpu_custom_call.1} parent=1 // pred_region
      %s78 = ssub.s32 16, 16
      %79 = vsyncadd [#allocation9], %s78
      %s81 = sshll.u32 [#allocation8], 4
      %s82 = int_to_ptr.vmem [resolvable:$true] %s81
      %84 = dma.vmem_to_hbm [thread:$0]  %s82, 16, %s3, [#allocation9]
    $region25: #{tpu_custom_call.1} parent=1 // pred_fallthru
      _
    // Predicated region
    $region26: #{tpu_custom_call.1} parent=1 // pred_check
      _
    $region27: #{tpu_custom_call.1} parent=1 // pred_check_branch
      %86 = sbr.rel (0) target = $region29
    $region28: #{tpu_custom_call.1} parent=1 // pred_region
      %87 = dma.done [#allocation4], 128
    $region29: #{tpu_custom_call.1} parent=1 // pred_fallthru
      _
    // Predicated region
    $region30: #{tpu_custom_call.1} parent=1 // pred_check
      _
    $region31: #{tpu_custom_call.1} parent=1 // pred_check_branch
      %89 = sbr.rel (0) target = $region33
    $region32: #{tpu_custom_call.1} parent=1 // pred_region
      %90 = dma.done [#allocation9], 16
    $region33: #{tpu_custom_call.1} parent=1 // pred_fallthru
      _
    %91 = vsyncpa [#allocation3], 1
    %92 = vsyncpa [#allocation6], 1
    %93 = vsyncpa [#allocation4], 1
    %94 = vsyncpa [#allocation9], 1

</llo_original>
